<compile_context>
chip_gen: v7x
topology: tpu7x:2x2x1
jax: 0.10.0
libtpu: 0.0.40
codegen_flags: <defaults>
</compile_context>

<pallas_src>
import functools
import math

import jax
import jax.numpy as jnp
from jax import lax
from jax.experimental import pallas as pl
from jax.experimental.pallas import tpu as pltpu


def mha_kernel(q_ref, k_ref, v_ref,
               wq_ref, bq_ref, wk_ref, bk_ref, wv_ref, bv_ref,
               wo_ref, bo_ref,
               out_ref, attn_ref):
    """One (batch, query-tile, head) step. All matmuls: bf16 in, f32 accumulate."""
    h = pl.program_id(2)

    q = q_ref[0]        # [tq, D]  bf16
    k = k_ref[0]        # [S,  D]  bf16
    v = v_ref[0]        # [S,  D]  bf16
    wq = wq_ref[0]      # [D, hd]  bf16  (1/sqrt(hd) already folded in)
    wk = wk_ref[0]      # [D, hd]  bf16
    wv = wv_ref[0]      # [D, hd]  bf16
    wo = wo_ref[0]      # [hd, D]  bf16

    # Per-head projections (full-D contraction on the MXU).
    qh = jnp.dot(q, wq, preferred_element_type=jnp.float32) + bq_ref[0]   # [tq, hd] f32
    kh = jnp.dot(k, wk, preferred_element_type=jnp.float32) + bk_ref[0]   # [S,  hd] f32
    vh = jnp.dot(v, wv, preferred_element_type=jnp.float32) + bv_ref[0]   # [S,  hd] f32

    # energy = (Q / sqrt(hd)) @ K^T   (scale pre-folded into wq/bq)
    scores = lax.dot_general(
        qh.astype(jnp.bfloat16), kh.astype(jnp.bfloat16),
        dimension_numbers=(((1,), (1,)), ((), ())),
        preferred_element_type=jnp.float32)                                # [tq, S] f32

    # Numerically stable softmax; reciprocal on the EUP instead of a VALU divide.
    m = jnp.max(scores, axis=-1, keepdims=True)
    e = jnp.exp(scores - m)
    p = e * pl.reciprocal(jnp.sum(e, axis=-1, keepdims=True), approx=True)  # [tq, S]

    attn_ref[0, 0] = p                     # lane-dense [tq, S] store

    ctx = jnp.dot(p.astype(jnp.bfloat16), vh.astype(jnp.bfloat16),
                  preferred_element_type=jnp.float32)                      # [tq, hd]

    # Per-head slice of the output projection; summing over heads == concat @ Wo^T.
    partial = jnp.dot(ctx.astype(jnp.bfloat16), wo,
                      preferred_element_type=jnp.float32)                  # [tq, D]

    @pl.when(h == 0)
    def _init():
        out_ref[0] = partial + bo_ref[...]          # bias added once

    @pl.when(h != 0)
    def _accum():
        out_ref[0] = out_ref[0] + partial


def conventional_attention(q, k, v, params, n_heads, q_block=256):
    """params = (wq, bq, wk, bk, wv, bv, wo, bo) in torch Linear layout:
    weights [D_out, D_in], biases [D_out]. Returns (output, attention_weights)."""
    wq, bq, wk, bk, wv, bv, wo, bo = params
    B, S, D = q.shape
    assert D % n_heads == 0, "d_model must be divisible by n_heads"
    hd = D // n_heads
    inv_scale = 1.0 / math.sqrt(hd)

    # ---- wrapper-side layout prep (plain XLA, effectively free) ----------
    def split_proj(w, b, scale=1.0):
        # w: [D_out, D_in] torch layout -> w.T: [D_in, D_out]; split D_out into heads.
        w_heads = (w.T * scale).reshape(D, n_heads, hd).transpose(1, 0, 2)   # [H, D, hd]
        b_heads = (b * scale).reshape(n_heads, 1, hd)                        # [H, 1, hd]
        return w_heads.astype(jnp.bfloat16), b_heads.astype(jnp.float32)

    wq_h, bq_h = split_proj(wq, bq, inv_scale)   # fold 1/sqrt(hd) into the Q path
    wk_h, bk_h = split_proj(wk, bk)
    wv_h, bv_h = split_proj(wv, bv)
    wo_h = wo.T.reshape(n_heads, hd, D).astype(jnp.bfloat16)                 # [H, hd, D]
    bo_r = bo.reshape(1, D).astype(jnp.float32)

    qb = q.astype(jnp.bfloat16)
    kb = k.astype(jnp.bfloat16)
    vb = v.astype(jnp.bfloat16)

    # Query tiling: bounded VMEM per step (attn block is tq*S, not S*S*H).
    tq = q_block if (S % q_block == 0) else S
    n_q = S // tq
    grid = (B, n_q, n_heads)

    q_spec    = pl.BlockSpec((1, tq, D),     lambda b, qi, h: (b, qi, 0))
    kv_spec   = pl.BlockSpec((1, S, D),      lambda b, qi, h: (b, 0, 0))
    wproj     = pl.BlockSpec((1, D, hd),     lambda b, qi, h: (h, 0, 0))
    bproj     = pl.BlockSpec((1, 1, hd),     lambda b, qi, h: (h, 0, 0))
    wo_spec   = pl.BlockSpec((1, hd, D),     lambda b, qi, h: (h, 0, 0))
    bo_spec   = pl.BlockSpec((1, D),         lambda b, qi, h: (0, 0))
    out_spec  = pl.BlockSpec((1, tq, D),     lambda b, qi, h: (b, qi, 0))   # resident over h
    attn_spec = pl.BlockSpec((1, 1, tq, S),  lambda b, qi, h: (b, h, qi, 0))

    out, attn = pl.pallas_call(
        mha_kernel,
        out_shape=(jax.ShapeDtypeStruct((B, S, D), jnp.float32),
                   jax.ShapeDtypeStruct((B, n_heads, S, S), jnp.float32)),
        grid_spec=pltpu.PrefetchScalarGridSpec(
            num_scalar_prefetch=0,
            grid=grid,
            in_specs=[q_spec, kv_spec, kv_spec,
                      wproj, bproj, wproj, bproj, wproj, bproj,
                      wo_spec, bo_spec],
            out_specs=(out_spec, attn_spec)),
        compiler_params=pltpu.CompilerParams(
            dimension_semantics=("parallel", "parallel", "arbitrary")),
    )(qb, kb, vb, wq_h, bq_h, wk_h, bk_h, wv_h, bv_h, wo_h, bo_r)
    return out, attn


def _reference(q, k, v, params, n_heads):
    """Pure-JAX f32 reference of the PyTorch forward (mask=None, eval-mode dropout)."""
    wq, bq, wk, bk, wv, bv, wo, bo = params
    B, S, D = q.shape
    hd = D // n_heads
    scale = math.sqrt(hd)

    def split(x):  # [B, S, D] -> [B, H, S, hd]
        return x.reshape(B, S, n_heads, hd).transpose(0, 2, 1, 3)

    Q = split(q @ wq.T + bq)
    K = split(k @ wk.T + bk)
    V = split(v @ wv.T + bv)
    energy = jnp.einsum('bhqd,bhkd->bhqk', Q, K) / scale
    attn = jax.nn.softmax(energy, axis=-1)
    x = jnp.einsum('bhqk,bhkd->bhqd', attn, V)
    x = x.transpose(0, 2, 1, 3).reshape(B, S, D)
    out = x @ wo.T + bo
    return out, attn


if __name__ == "__main__":
    B, S, D, H = 2, 8, 32, 4  # batch, seq, d_model, n_heads

    key = jax.random.PRNGKey(0)
    ks = jax.random.split(key, 11)

    q = jax.random.normal(ks[0], (B, S, D), dtype=jnp.float32)
    k = jax.random.normal(ks[1], (B, S, D), dtype=jnp.float32)
    v = jax.random.normal(ks[2], (B, S, D), dtype=jnp.float32)

    # PyTorch-like Linear init: U(-1/sqrt(fan_in), 1/sqrt(fan_in)), torch layout.
    bound = 1.0 / math.sqrt(D)

    def linear_params(kw, kb):
        w = jax.random.uniform(kw, (D, D), jnp.float32, -bound, bound)  # [out, in]
        b = jax.random.uniform(kb, (D,), jnp.float32, -bound, bound)    # [out]
        return w, b

    wq, bq = linear_params(ks[3], ks[4])
    wk, bk = linear_params(ks[5], ks[6])
    wv, bv = linear_params(ks[7], ks[8])
    wo, bo = linear_params(ks[9], ks[10])
    params = (wq, bq, wk, bk, wv, bv, wo, bo)

    out, attn = conventional_attention(q, k, v, params, n_heads=H)
    jax.block_until_ready((out, attn))

    # Correctness vs f32 reference (tolerances loosened for bf16 MXU inputs).
    ref_out, ref_attn = _reference(q, k, v, params, n_heads=H)
    assert jnp.allclose(out, ref_out, rtol=2e-2, atol=2e-2), "output mismatch"
    assert jnp.allclose(attn, ref_attn, rtol=2e-2, atol=2e-2), "attention mismatch"

    print("KERNEL_OK")
</pallas_src>

<mosaic_0001>
module attributes {stable_mosaic.version = 11 : i64} {
  func.func @mha_kernel(%arg0: i32, %arg1: i32, %arg2: i32, %arg3: memref<1x8x32xbf16, #tpu.memory_space<vmem>>, %arg4: memref<1x8x32xbf16, #tpu.memory_space<vmem>>, %arg5: memref<1x8x32xbf16, #tpu.memory_space<vmem>>, %arg6: memref<1x32x8xbf16, #tpu.memory_space<vmem>>, %arg7: memref<1x1x8xf32, #tpu.memory_space<vmem>>, %arg8: memref<1x32x8xbf16, #tpu.memory_space<vmem>>, %arg9: memref<1x1x8xf32, #tpu.memory_space<vmem>>, %arg10: memref<1x32x8xbf16, #tpu.memory_space<vmem>>, %arg11: memref<1x1x8xf32, #tpu.memory_space<vmem>>, %arg12: memref<1x8x32xbf16, #tpu.memory_space<vmem>>, %arg13: memref<1x32xf32, #tpu.memory_space<vmem>>, %arg14: memref<1x8x32xf32, #tpu.memory_space<vmem>>, %arg15: memref<1x1x8x8xf32, #tpu.memory_space<vmem>>) attributes {dimension_semantics = [#tpu.dimension_semantics<parallel>, #tpu.dimension_semantics<parallel>, #tpu.dimension_semantics<arbitrary>], iteration_bounds = array<i64: 2, 1, 4>, scalar_prefetch = 0 : i64, scratch_operands = 0 : i64, tpu.core_type = #tpu.core_type<tc>, window_params = [{transform_indices = @transform_0, window_bounds = array<i64: 1, 8, 32>}, {transform_indices = @transform_1, window_bounds = array<i64: 1, 8, 32>}, {transform_indices = @transform_2, window_bounds = array<i64: 1, 8, 32>}, {transform_indices = @transform_3, window_bounds = array<i64: 1, 32, 8>}, {transform_indices = @transform_4, window_bounds = array<i64: 1, 1, 8>}, {transform_indices = @transform_5, window_bounds = array<i64: 1, 32, 8>}, {transform_indices = @transform_6, window_bounds = array<i64: 1, 1, 8>}, {transform_indices = @transform_7, window_bounds = array<i64: 1, 32, 8>}, {transform_indices = @transform_8, window_bounds = array<i64: 1, 1, 8>}, {transform_indices = @transform_9, window_bounds = array<i64: 1, 8, 32>}, {pipeline_mode = #tpu.pipeline_mode<synchronous>, transform_indices = @transform_10, window_bounds = array<i64: 1, 32>}, {transform_indices = @transform_11, window_bounds = array<i64: 1, 8, 32>}, {transform_indices = @transform_12, window_bounds = array<i64: 1, 1, 8, 8>}]} {
    %c0 = arith.constant 0 : index
    %c0_0 = arith.constant 0 : index
    %c0_1 = arith.constant 0 : index
    %0 = vector.load %arg3[%c0, %c0_0, %c0_1] : memref<1x8x32xbf16, #tpu.memory_space<vmem>>, vector<1x8x32xbf16>
    %1 = vector.shape_cast %0 : vector<1x8x32xbf16> to vector<8x32xbf16>
    %c0_2 = arith.constant 0 : index
    %c0_3 = arith.constant 0 : index
    %c0_4 = arith.constant 0 : index
    %2 = vector.load %arg4[%c0_2, %c0_3, %c0_4] : memref<1x8x32xbf16, #tpu.memory_space<vmem>>, vector<1x8x32xbf16>
    %3 = vector.shape_cast %2 : vector<1x8x32xbf16> to vector<8x32xbf16>
    %c0_5 = arith.constant 0 : index
    %c0_6 = arith.constant 0 : index
    %c0_7 = arith.constant 0 : index
    %4 = vector.load %arg5[%c0_5, %c0_6, %c0_7] : memref<1x8x32xbf16, #tpu.memory_space<vmem>>, vector<1x8x32xbf16>
    %5 = vector.shape_cast %4 : vector<1x8x32xbf16> to vector<8x32xbf16>
    %c0_8 = arith.constant 0 : index
    %c0_9 = arith.constant 0 : index
    %c0_10 = arith.constant 0 : index
    %6 = vector.load %arg6[%c0_8, %c0_9, %c0_10] : memref<1x32x8xbf16, #tpu.memory_space<vmem>>, vector<1x32x8xbf16>
    %7 = vector.shape_cast %6 : vector<1x32x8xbf16> to vector<32x8xbf16>
    %c0_11 = arith.constant 0 : index
    %c0_12 = arith.constant 0 : index
    %c0_13 = arith.constant 0 : index
    %8 = vector.load %arg8[%c0_11, %c0_12, %c0_13] : memref<1x32x8xbf16, #tpu.memory_space<vmem>>, vector<1x32x8xbf16>
    %9 = vector.shape_cast %8 : vector<1x32x8xbf16> to vector<32x8xbf16>
    %c0_14 = arith.constant 0 : index
    %c0_15 = arith.constant 0 : index
    %c0_16 = arith.constant 0 : index
    %10 = vector.load %arg10[%c0_14, %c0_15, %c0_16] : memref<1x32x8xbf16, #tpu.memory_space<vmem>>, vector<1x32x8xbf16>
    %11 = vector.shape_cast %10 : vector<1x32x8xbf16> to vector<32x8xbf16>
    %c0_17 = arith.constant 0 : index
    %c0_18 = arith.constant 0 : index
    %c0_19 = arith.constant 0 : index
    %12 = vector.load %arg12[%c0_17, %c0_18, %c0_19] : memref<1x8x32xbf16, #tpu.memory_space<vmem>>, vector<1x8x32xbf16>
    %13 = vector.shape_cast %12 : vector<1x8x32xbf16> to vector<8x32xbf16>
    %cst = arith.constant dense<0.000000e+00> : vector<8x8xf32>
    %14 = tpu.matmul %1, %7, %cst {dimension_numbers = #tpu.dot_dimension_numbers<[1], [0], [0], [1], [0, 0, 1, 1], [], []>} : vector<8x32xbf16>, vector<32x8xbf16>, vector<8x8xf32> -> vector<8x8xf32>
    %c0_20 = arith.constant 0 : index
    %c0_21 = arith.constant 0 : index
    %c0_22 = arith.constant 0 : index
    %15 = vector.load %arg7[%c0_20, %c0_21, %c0_22] : memref<1x1x8xf32, #tpu.memory_space<vmem>>, vector<1x1x8xf32>
    %16 = vector.shape_cast %15 : vector<1x1x8xf32> to vector<1x8xf32>
    %17 = vector.broadcast %16 : vector<1x8xf32> to vector<8x8xf32>
    %18 = arith.addf %14, %17 : vector<8x8xf32>
    %cst_23 = arith.constant dense<0.000000e+00> : vector<8x8xf32>
    %19 = tpu.matmul %3, %9, %cst_23 {dimension_numbers = #tpu.dot_dimension_numbers<[1], [0], [0], [1], [0, 0, 1, 1], [], []>} : vector<8x32xbf16>, vector<32x8xbf16>, vector<8x8xf32> -> vector<8x8xf32>
    %c0_24 = arith.constant 0 : index
    %c0_25 = arith.constant 0 : index
    %c0_26 = arith.constant 0 : index
    %20 = vector.load %arg9[%c0_24, %c0_25, %c0_26] : memref<1x1x8xf32, #tpu.memory_space<vmem>>, vector<1x1x8xf32>
    %21 = vector.shape_cast %20 : vector<1x1x8xf32> to vector<1x8xf32>
    %22 = vector.broadcast %21 : vector<1x8xf32> to vector<8x8xf32>
    %23 = arith.addf %19, %22 : vector<8x8xf32>
    %cst_27 = arith.constant dense<0.000000e+00> : vector<8x8xf32>
    %24 = tpu.matmul %5, %11, %cst_27 {dimension_numbers = #tpu.dot_dimension_numbers<[1], [0], [0], [1], [0, 0, 1, 1], [], []>} : vector<8x32xbf16>, vector<32x8xbf16>, vector<8x8xf32> -> vector<8x8xf32>
    %c0_28 = arith.constant 0 : index
    %c0_29 = arith.constant 0 : index
    %c0_30 = arith.constant 0 : index
    %25 = vector.load %arg11[%c0_28, %c0_29, %c0_30] : memref<1x1x8xf32, #tpu.memory_space<vmem>>, vector<1x1x8xf32>
    %26 = vector.shape_cast %25 : vector<1x1x8xf32> to vector<1x8xf32>
    %27 = vector.broadcast %26 : vector<1x8xf32> to vector<8x8xf32>
    %28 = arith.addf %24, %27 : vector<8x8xf32>
    %29 = arith.truncf %18 : vector<8x8xf32> to vector<8x8xbf16>
    %30 = arith.truncf %23 : vector<8x8xf32> to vector<8x8xbf16>
    %cst_31 = arith.constant dense<0.000000e+00> : vector<8x8xf32>
    %31 = tpu.matmul %29, %30, %cst_31 {dimension_numbers = #tpu.dot_dimension_numbers<[1], [1], [0], [0], [0, 0, 1, 0], [], []>} : vector<8x8xbf16>, vector<8x8xbf16>, vector<8x8xf32> -> vector<8x8xf32>
    %cst_32 = arith.constant dense<0xFF800000> : vector<8xf32>
    %32 = vector.multi_reduction <maximumf>, %31, %cst_32 [1] : vector<8x8xf32> to vector<8xf32>
    %33 = vector.shape_cast %32 : vector<8xf32> to vector<8x1xf32>
    %34 = vector.broadcast %33 : vector<8x1xf32> to vector<8x8xf32>
    %35 = arith.subf %31, %34 : vector<8x8xf32>
    %36 = math.exp %35 : vector<8x8xf32>
    %cst_33 = arith.constant dense<0.000000e+00> : vector<8xf32>
    %37 = vector.multi_reduction <add>, %36, %cst_33 [1] : vector<8x8xf32> to vector<8xf32>
    %38 = vector.shape_cast %37 : vector<8xf32> to vector<8x1xf32>
    %39 = tpu.reciprocal %38 {approx = true} : vector<8x1xf32> -> vector<8x1xf32>
    %40 = vector.broadcast %39 : vector<8x1xf32> to vector<8x8xf32>
    %41 = arith.mulf %36, %40 : vector<8x8xf32>
    %c0_34 = arith.constant 0 : index
    %c0_35 = arith.constant 0 : index
    %c0_36 = arith.constant 0 : index
    %c0_37 = arith.constant 0 : index
    %42 = vector.load %arg15[%c0_34, %c0_35, %c0_36, %c0_37] : memref<1x1x8x8xf32, #tpu.memory_space<vmem>>, vector<1x1x8x8xf32>
    %43 = vector.shape_cast %42 : vector<1x1x8x8xf32> to vector<8x8xf32>
    %44 = vector.shape_cast %41 : vector<8x8xf32> to vector<1x1x8x8xf32>
    tpu.vector_store %arg15[%c0_34, %c0_35, %c0_36, %c0_37], %44 {strides = array<i32>} : memref<1x1x8x8xf32, #tpu.memory_space<vmem>>, vector<1x1x8x8xf32>,
    %45 = arith.truncf %41 : vector<8x8xf32> to vector<8x8xbf16>
    %46 = arith.truncf %28 : vector<8x8xf32> to vector<8x8xbf16>
    %cst_38 = arith.constant dense<0.000000e+00> : vector<8x8xf32>
    %47 = tpu.matmul %45, %46, %cst_38 {dimension_numbers = #tpu.dot_dimension_numbers<[1], [0], [0], [1], [0, 0, 1, 1], [], []>} : vector<8x8xbf16>, vector<8x8xbf16>, vector<8x8xf32> -> vector<8x8xf32>
    %48 = arith.truncf %47 : vector<8x8xf32> to vector<8x8xbf16>
    %cst_39 = arith.constant dense<0.000000e+00> : vector<8x32xf32>
    %49 = tpu.matmul %48, %13, %cst_39 {dimension_numbers = #tpu.dot_dimension_numbers<[1], [0], [0], [1], [0, 0, 1, 1], [], []>} : vector<8x8xbf16>, vector<8x32xbf16>, vector<8x32xf32> -> vector<8x32xf32>
    %c0_i32 = arith.constant 0 : i32
    %50 = arith.cmpi eq, %arg2, %c0_i32 : i32
    %51 = arith.extui %50 : i1 to i32
    %c0_i32_40 = arith.constant 0 : i32
    %52 = arith.cmpi ne, %51, %c0_i32_40 : i32
    scf.if %52 {
      %c0_43 = arith.constant 0 : index
      %c0_44 = arith.constant 0 : index
      %56 = vector.load %arg13[%c0_43, %c0_44] : memref<1x32xf32, #tpu.memory_space<vmem>>, vector<1x32xf32>
      %57 = vector.broadcast %56 : vector<1x32xf32> to vector<8x32xf32>
      %58 = arith.addf %49, %57 : vector<8x32xf32>
      %c0_45 = arith.constant 0 : index
      %c0_46 = arith.constant 0 : index
      %c0_47 = arith.constant 0 : index
      %59 = vector.load %arg14[%c0_45, %c0_46, %c0_47] : memref<1x8x32xf32, #tpu.memory_space<vmem>>, vector<1x8x32xf32>
      %60 = vector.shape_cast %59 : vector<1x8x32xf32> to vector<8x32xf32>
      %61 = vector.shape_cast %58 : vector<8x32xf32> to vector<1x8x32xf32>
      tpu.vector_store %arg14[%c0_45, %c0_46, %c0_47], %61 {strides = array<i32>} : memref<1x8x32xf32, #tpu.memory_space<vmem>>, vector<1x8x32xf32>,
    } else {
    }
    %c0_i32_41 = arith.constant 0 : i32
    %53 = arith.cmpi ne, %arg2, %c0_i32_41 : i32
    %54 = arith.extui %53 : i1 to i32
    %c0_i32_42 = arith.constant 0 : i32
    %55 = arith.cmpi ne, %54, %c0_i32_42 : i32
    scf.if %55 {
      %c0_43 = arith.constant 0 : index
      %c0_44 = arith.constant 0 : index
      %c0_45 = arith.constant 0 : index
      %56 = vector.load %arg14[%c0_43, %c0_44, %c0_45] : memref<1x8x32xf32, #tpu.memory_space<vmem>>, vector<1x8x32xf32>
      %57 = vector.shape_cast %56 : vector<1x8x32xf32> to vector<8x32xf32>
      %58 = arith.addf %57, %49 : vector<8x32xf32>
      %c0_46 = arith.constant 0 : index
      %c0_47 = arith.constant 0 : index
      %c0_48 = arith.constant 0 : index
      %59 = vector.load %arg14[%c0_46, %c0_47, %c0_48] : memref<1x8x32xf32, #tpu.memory_space<vmem>>, vector<1x8x32xf32>
      %60 = vector.shape_cast %59 : vector<1x8x32xf32> to vector<8x32xf32>
      %61 = vector.shape_cast %58 : vector<8x32xf32> to vector<1x8x32xf32>
      tpu.vector_store %arg14[%c0_46, %c0_47, %c0_48], %61 {strides = array<i32>} : memref<1x8x32xf32, #tpu.memory_space<vmem>>, vector<1x8x32xf32>,
    } else {
    }
    return
  }
  func.func @transform_0(%arg0: i32, %arg1: i32, %arg2: i32) -> (i32, i32, i32) {
    %c0_i32 = arith.constant 0 : i32
    %c0_i32_0 = arith.constant 0 : i32
    return %arg0, %arg1, %c0_i32 : i32, i32, i32
  }
  func.func @transform_1(%arg0: i32, %arg1: i32, %arg2: i32) -> (i32, i32, i32) {
    %c0_i32 = arith.constant 0 : i32
    %c0_i32_0 = arith.constant 0 : i32
    %c0_i32_1 = arith.constant 0 : i32
    return %arg0, %c0_i32, %c0_i32_0 : i32, i32, i32
  }
  func.func @transform_2(%arg0: i32, %arg1: i32, %arg2: i32) -> (i32, i32, i32) {
    %c0_i32 = arith.constant 0 : i32
    %c0_i32_0 = arith.constant 0 : i32
    %c0_i32_1 = arith.constant 0 : i32
    return %arg0, %c0_i32, %c0_i32_0 : i32, i32, i32
  }
  func.func @transform_3(%arg0: i32, %arg1: i32, %arg2: i32) -> (i32, i32, i32) {
    %c0_i32 = arith.constant 0 : i32
    %c0_i32_0 = arith.constant 0 : i32
    %c0_i32_1 = arith.constant 0 : i32
    return %arg2, %c0_i32, %c0_i32_0 : i32, i32, i32
  }
  func.func @transform_4(%arg0: i32, %arg1: i32, %arg2: i32) -> (i32, i32, i32) {
    %c0_i32 = arith.constant 0 : i32
    %c0_i32_0 = arith.constant 0 : i32
    %c0_i32_1 = arith.constant 0 : i32
    return %arg2, %c0_i32, %c0_i32_0 : i32, i32, i32
  }
  func.func @transform_5(%arg0: i32, %arg1: i32, %arg2: i32) -> (i32, i32, i32) {
    %c0_i32 = arith.constant 0 : i32
    %c0_i32_0 = arith.constant 0 : i32
    %c0_i32_1 = arith.constant 0 : i32
    return %arg2, %c0_i32, %c0_i32_0 : i32, i32, i32
  }
  func.func @transform_6(%arg0: i32, %arg1: i32, %arg2: i32) -> (i32, i32, i32) {
    %c0_i32 = arith.constant 0 : i32
    %c0_i32_0 = arith.constant 0 : i32
    %c0_i32_1 = arith.constant 0 : i32
    return %arg2, %c0_i32, %c0_i32_0 : i32, i32, i32
  }
  func.func @transform_7(%arg0: i32, %arg1: i32, %arg2: i32) -> (i32, i32, i32) {
    %c0_i32 = arith.constant 0 : i32
    %c0_i32_0 = arith.constant 0 : i32
    %c0_i32_1 = arith.constant 0 : i32
    return %arg2, %c0_i32, %c0_i32_0 : i32, i32, i32
  }
  func.func @transform_8(%arg0: i32, %arg1: i32, %arg2: i32) -> (i32, i32, i32) {
    %c0_i32 = arith.constant 0 : i32
    %c0_i32_0 = arith.constant 0 : i32
    %c0_i32_1 = arith.constant 0 : i32
    return %arg2, %c0_i32, %c0_i32_0 : i32, i32, i32
  }
  func.func @transform_9(%arg0: i32, %arg1: i32, %arg2: i32) -> (i32, i32, i32) {
    %c0_i32 = arith.constant 0 : i32
    %c0_i32_0 = arith.constant 0 : i32
    %c0_i32_1 = arith.constant 0 : i32
    return %arg2, %c0_i32, %c0_i32_0 : i32, i32, i32
  }
  func.func @transform_10(%arg0: i32, %arg1: i32, %arg2: i32) -> (i32, i32) {
    %c0_i32 = arith.constant 0 : i32
    %c0_i32_0 = arith.constant 0 : i32
    %c0_i32_1 = arith.constant 0 : i32
    return %c0_i32, %c0_i32_0 : i32, i32
  }
  func.func @transform_11(%arg0: i32, %arg1: i32, %arg2: i32) -> (i32, i32, i32) {
    %c0_i32 = arith.constant 0 : i32
    %c0_i32_0 = arith.constant 0 : i32
    return %arg0, %arg1, %c0_i32 : i32, i32, i32
  }
  func.func @transform_12(%arg0: i32, %arg1: i32, %arg2: i32) -> (i32, i32, i32, i32) {
    %c0_i32 = arith.constant 0 : i32
    %c0_i32_0 = arith.constant 0 : i32
    return %arg0, %arg2, %arg1, %c0_i32 : i32, i32, i32, i32
  }
}

</mosaic_0001>

<llo_original>
// kernel: tpu_custom_call.1
$region0: #{tpu_custom_call.1}
  #allocation0 [shape = 'u32[]', space=smem, size = 0x4, offset = 0x4, fixed_abs, tag = 'smem constant byte address 0x4 - core index']
  #allocation1 [shape = 'u32[144,128]{1,0:T(1,128)}', space=vmem, size = 0x12000, scoped, tag = 'internal scratch']
  %s0 = inlined_call_operand.vmem [shape: bf16[2,8,32], index: 0, kind: input, shape index: {}]
  %s1 = inlined_call_operand.vmem [shape: bf16[2,8,32], index: 1, kind: input, shape index: {}]
  %s2 = inlined_call_operand.vmem [shape: bf16[2,8,32], index: 2, kind: input, shape index: {}]
  %s3 = inlined_call_operand.vmem [shape: bf16[4,32,8], index: 3, kind: input, shape index: {}]
  %s4 = inlined_call_operand.vmem [shape: f32[4,1,8], index: 4, kind: input, shape index: {}]
  %s5 = inlined_call_operand.vmem [shape: bf16[4,32,8], index: 5, kind: input, shape index: {}]
  %s6 = inlined_call_operand.vmem [shape: f32[4,1,8], index: 6, kind: input, shape index: {}]
  %s7 = inlined_call_operand.vmem [shape: bf16[4,32,8], index: 7, kind: input, shape index: {}]
  %s8 = inlined_call_operand.vmem [shape: f32[4,1,8], index: 8, kind: input, shape index: {}]
  %s9 = inlined_call_operand.vmem [shape: bf16[4,8,32], index: 9, kind: input, shape index: {}]
  %s10 = inlined_call_operand.vmem [shape: f32[1,32], index: 10, kind: input, shape index: {}]
  %s11 = inlined_call_operand.hbm [shape: f32[2,8,32], index: 11, kind: output, shape index: {0}]
  %s12 = inlined_call_operand.hbm [shape: f32[2,4,8,8], index: 12, kind: output, shape index: {1}]
  %13 = xla_tuple %s11, %s12
  %s14 = sld [smem:[#allocation0]]
  $region93: #{tpu_custom_call.1} parent=0
    _
  %s16 = ssub.s32 1, %s14
  %s17 = scalar_select 0, %s16, %s14
  $region1: #{tpu_custom_call.1} parent=0
    #allocation2 [shape = 'u8[8192]{0}', space=vmem, size = 0x2000, scoped, tag = 'output window, operand 0']
    #allocation3 [shape = 's32[2]{0}', space=sflag, size = 0x8, scoped, tag = 'scoped memory for tpu_custom_call.1']
    #allocation4 [shape = 'u8[8192]{0}', space=vmem, size = 0x2000, scoped, tag = 'output window, operand 1']
    #allocation5 [shape = 's32[2]{0}', space=sflag, size = 0x8, scoped, tag = 'scoped memory for tpu_custom_call.1']
    %18 = vsyncpa [#allocation3], 0
    %s19 = scalar_lea.sflag [#allocation3], 1
    %20 = vsyncpa %s19, 0
    %21 = vsyncpa [#allocation5], 0
    %s22 = scalar_lea.sflag [#allocation5], 1
    %23 = vsyncpa %s22, 0
    loop: start=0, step=1, limit=10
    $region2: #{tpu_custom_call.1} parent=1 // loop_pre_header
      _
    $region3: #{tpu_custom_call.1} parent=1 // loop_header
      %s25 = sphi 0, %s29
      %p26 = scmp.ge.s32.totalorder %s25, 10
      %s32 = sphi 0, %s51
      %s33 = sphi 0, %s47
      %s34 = sphi 0, %s43
      %s35 = sphi 0, %s32
      %s36 = sphi 0, %s33
      %s37 = sphi 0, %s34
      %s38 = sphi 0, %s35
      %s39 = sphi 0, %s36
      %s40 = sphi 0, %s37
      %s56 = sphi 0, %s58
      %s59 = sphi 0, %s56
      %s60 = sphi 0, %s59
      %s76 = sphi 0, %s60
      %s82 = sphi 0, %s84
      %s85 = sphi 0, %s82
      %s86 = sphi 0, %s85
      %s102 = sphi 0, %s86
      %s108 = sphi 0, %s110
      %s111 = sphi 0, %s108
      %s112 = sphi 0, %s111
      %s128 = sphi 0, %s112
      %s134 = sphi 0, %s136
      %s137 = sphi 0, %s134
      %s138 = sphi 0, %s137
      %s154 = sphi 0, %s138
      %s160 = sphi 0, %s162
      %s163 = sphi 0, %s160
      %s164 = sphi 0, %s163
      %s180 = sphi 0, %s164
      %s186 = sphi 0, %s188
      %s189 = sphi 0, %s186
      %s190 = sphi 0, %s189
      %s206 = sphi 0, %s190
      %s212 = sphi 0, %s214
      %s215 = sphi 0, %s212
      %s216 = sphi 0, %s215
      %s232 = sphi 0, %s216
      %s238 = sphi 0, %s240
      %s241 = sphi 0, %s238
      %s242 = sphi 0, %s241
      %s258 = sphi 0, %s242
      %s264 = sphi 0, %s266
      %s267 = sphi 0, %s264
      %s268 = sphi 0, %s267
      %s284 = sphi 0, %s268
      %s290 = sphi 0, %s292
      %s293 = sphi 0, %s290
      %s294 = sphi 0, %s293
      %s310 = sphi 0, %s294
      %s314 = sphi 0, %s314
      %s316 = sphi 0, %s314
      %s317 = sphi 0, %s316
      %s331 = sphi 0, %s317
      %s339 = sphi 0, %s341
      %s342 = sphi 0, %s339
      %s343 = sphi 0, %s342
      %s359 = sphi 0, %s343
      %s369 = sphi 0, %s371
      %s372 = sphi 0, %s369
      %s373 = sphi 0, %s372
      %s389 = sphi 0, %s373
    $region4: #{tpu_custom_call.1} parent=1 // loop_header_branch
      %28 = sbr.rel (%p26) target = $region8
    $region5: #{tpu_custom_call.1} parent=1 // loop_body
      %s30 = ssub.s32 %s25, 1
      %s31 = ssub.s32 %s25, 2
      %s41 = sadd.s32 1, %s34
      %p42 = scmp.ge.s32.totalorder %s41, 4
      %s43 = scalar_select %p42, 0, %s41
      %s44 = sadd.s32 1, %s33
      %s45 = scalar_select %p42, %s44, %s33
      %p46 = scmp.ge.s32.totalorder %s45, 1
      %s47 = scalar_select %p46, 0, %s45
      %s48 = sadd.s32 1, %s32
      %s49 = scalar_select %p46, %s48, %s32
      %p50 = scmp.ge.s32.totalorder %s49, 2
      %s51 = scalar_select %p50, 0, %s49
      %s52 = ssub.s32 %s32, %s51
      %s53 = ssub.s32 %s33, %s47
      %s54 = sor.u32 %s52, %s53
      %p55 = scmp.eq.s32.totalorder %s54, 0
      %s57 = sadd.s32 %s56, 1
      %s58 = scalar_select %p55, %s56, %s57
      %p61 = pneg %p55
      %p62 = scmp.eq.s32.totalorder %s25, 7
      %p63 = por %p61, %p62
      %p64 = scmp.ne.s32.totalorder %s56, %s59
      %p65 = scmp.eq.s32.totalorder %s25, 0
      %p66 = por %p64, %p65
      %p67 = scmp.ne.s32.totalorder %s56, %s59
      %p68 = scmp.eq.s32.totalorder %s30, 7
      %p69 = por %p67, %p68
      %p70 = scmp.ne.s32.totalorder %s59, %s60
      %p71 = scmp.eq.s32.totalorder %s30, 0
      %p72 = por %p70, %p71
      %p73 = scmp.ne.s32.totalorder %s59, %s60
      %p74 = scmp.eq.s32.totalorder %s31, 7
      %p75 = por %p73, %p74
      %p77 = scmp.ne.s32.totalorder %s60, %s76
      %p78 = scmp.eq.s32.totalorder %s31, 0
      %p79 = por %p77, %p78
      %s80 = ssub.s32 %s32, %s51
      %p81 = scmp.eq.s32.totalorder %s80, 0
      %s83 = sadd.s32 %s82, 1
      %s84 = scalar_select %p81, %s82, %s83
      %p87 = pneg %p81
      %p88 = scmp.eq.s32.totalorder %s25, 7
      %p89 = por %p87, %p88
      %p90 = scmp.ne.s32.totalorder %s82, %s85
      %p91 = scmp.eq.s32.totalorder %s25, 0
      %p92 = por %p90, %p91
      %p93 = scmp.ne.s32.totalorder %s82, %s85
      %p94 = scmp.eq.s32.totalorder %s30, 7
      %p95 = por %p93, %p94
      %p96 = scmp.ne.s32.totalorder %s85, %s86
      %p97 = scmp.eq.s32.totalorder %s30, 0
      %p98 = por %p96, %p97
      %p99 = scmp.ne.s32.totalorder %s85, %s86
      %p100 = scmp.eq.s32.totalorder %s31, 7
      %p101 = por %p99, %p100
      %p103 = scmp.ne.s32.totalorder %s86, %s102
      %p104 = scmp.eq.s32.totalorder %s31, 0
      %p105 = por %p103, %p104
      %s106 = ssub.s32 %s32, %s51
      %p107 = scmp.eq.s32.totalorder %s106, 0
      %s109 = sadd.s32 %s108, 1
      %s110 = scalar_select %p107, %s108, %s109
      %p113 = pneg %p107
      %p114 = scmp.eq.s32.totalorder %s25, 7
      %p115 = por %p113, %p114
      %p116 = scmp.ne.s32.totalorder %s108, %s111
      %p117 = scmp.eq.s32.totalorder %s25, 0
      %p118 = por %p116, %p117
      %p119 = scmp.ne.s32.totalorder %s108, %s111
      %p120 = scmp.eq.s32.totalorder %s30, 7
      %p121 = por %p119, %p120
      %p122 = scmp.ne.s32.totalorder %s111, %s112
      %p123 = scmp.eq.s32.totalorder %s30, 0
      %p124 = por %p122, %p123
      %p125 = scmp.ne.s32.totalorder %s111, %s112
      %p126 = scmp.eq.s32.totalorder %s31, 7
      %p127 = por %p125, %p126
      %p129 = scmp.ne.s32.totalorder %s112, %s128
      %p130 = scmp.eq.s32.totalorder %s31, 0
      %p131 = por %p129, %p130
      %s132 = ssub.s32 %s34, %s43
      %p133 = scmp.eq.s32.totalorder %s132, 0
      %s135 = sadd.s32 %s134, 1
      %s136 = scalar_select %p133, %s134, %s135
      %p139 = pneg %p133
      %p140 = scmp.eq.s32.totalorder %s25, 7
      %p141 = por %p139, %p140
      %p142 = scmp.ne.s32.totalorder %s134, %s137
      %p143 = scmp.eq.s32.totalorder %s25, 0
      %p144 = por %p142, %p143
      %p145 = scmp.ne.s32.totalorder %s134, %s137
      %p146 = scmp.eq.s32.totalorder %s30, 7
      %p147 = por %p145, %p146
      %p148 = scmp.ne.s32.totalorder %s137, %s138
      %p149 = scmp.eq.s32.totalorder %s30, 0
      %p150 = por %p148, %p149
      %p151 = scmp.ne.s32.totalorder %s137, %s138
      %p152 = scmp.eq.s32.totalorder %s31, 7
      %p153 = por %p151, %p152
      %p155 = scmp.ne.s32.totalorder %s138, %s154
      %p156 = scmp.eq.s32.totalorder %s31, 0
      %p157 = por %p155, %p156
      %s158 = ssub.s32 %s34, %s43
      %p159 = scmp.eq.s32.totalorder %s158, 0
      %s161 = sadd.s32 %s160, 1
      %s162 = scalar_select %p159, %s160, %s161
      %p165 = pneg %p159
      %p166 = scmp.eq.s32.totalorder %s25, 7
      %p167 = por %p165, %p166
      %p168 = scmp.ne.s32.totalorder %s160, %s163
      %p169 = scmp.eq.s32.totalorder %s25, 0
      %p170 = por %p168, %p169
      %p171 = scmp.ne.s32.totalorder %s160, %s163
      %p172 = scmp.eq.s32.totalorder %s30, 7
      %p173 = por %p171, %p172
      %p174 = scmp.ne.s32.totalorder %s163, %s164
      %p175 = scmp.eq.s32.totalorder %s30, 0
      %p176 = por %p174, %p175
      %p177 = scmp.ne.s32.totalorder %s163, %s164
      %p178 = scmp.eq.s32.totalorder %s31, 7
      %p179 = por %p177, %p178
      %p181 = scmp.ne.s32.totalorder %s164, %s180
      %p182 = scmp.eq.s32.totalorder %s31, 0
      %p183 = por %p181, %p182
      %s184 = ssub.s32 %s34, %s43
      %p185 = scmp.eq.s32.totalorder %s184, 0
      %s187 = sadd.s32 %s186, 1
      %s188 = scalar_select %p185, %s186, %s187
      %p191 = pneg %p185
      %p192 = scmp.eq.s32.totalorder %s25, 7
      %p193 = por %p191, %p192
      %p194 = scmp.ne.s32.totalorder %s186, %s189
      %p195 = scmp.eq.s32.totalorder %s25, 0
      %p196 = por %p194, %p195
      %p197 = scmp.ne.s32.totalorder %s186, %s189
      %p198 = scmp.eq.s32.totalorder %s30, 7
      %p199 = por %p197, %p198
      %p200 = scmp.ne.s32.totalorder %s189, %s190
      %p201 = scmp.eq.s32.totalorder %s30, 0
      %p202 = por %p200, %p201
      %p203 = scmp.ne.s32.totalorder %s189, %s190
      %p204 = scmp.eq.s32.totalorder %s31, 7
      %p205 = por %p203, %p204
      %p207 = scmp.ne.s32.totalorder %s190, %s206
      %p208 = scmp.eq.s32.totalorder %s31, 0
      %p209 = por %p207, %p208
      %s210 = ssub.s32 %s34, %s43
      %p211 = scmp.eq.s32.totalorder %s210, 0
      %s213 = sadd.s32 %s212, 1
      %s214 = scalar_select %p211, %s212, %s213
      %p217 = pneg %p211
      %p218 = scmp.eq.s32.totalorder %s25, 7
      %p219 = por %p217, %p218
      %p220 = scmp.ne.s32.totalorder %s212, %s215
      %p221 = scmp.eq.s32.totalorder %s25, 0
      %p222 = por %p220, %p221
      %p223 = scmp.ne.s32.totalorder %s212, %s215
      %p224 = scmp.eq.s32.totalorder %s30, 7
      %p225 = por %p223, %p224
      %p226 = scmp.ne.s32.totalorder %s215, %s216
      %p227 = scmp.eq.s32.totalorder %s30, 0
      %p228 = por %p226, %p227
      %p229 = scmp.ne.s32.totalorder %s215, %s216
      %p230 = scmp.eq.s32.totalorder %s31, 7
      %p231 = por %p229, %p230
      %p233 = scmp.ne.s32.totalorder %s216, %s232
      %p234 = scmp.eq.s32.totalorder %s31, 0
      %p235 = por %p233, %p234
      %s236 = ssub.s32 %s34, %s43
      %p237 = scmp.eq.s32.totalorder %s236, 0
      %s239 = sadd.s32 %s238, 1
      %s240 = scalar_select %p237, %s238, %s239
      %p243 = pneg %p237
      %p244 = scmp.eq.s32.totalorder %s25, 7
      %p245 = por %p243, %p244
      %p246 = scmp.ne.s32.totalorder %s238, %s241
      %p247 = scmp.eq.s32.totalorder %s25, 0
      %p248 = por %p246, %p247
      %p249 = scmp.ne.s32.totalorder %s238, %s241
      %p250 = scmp.eq.s32.totalorder %s30, 7
      %p251 = por %p249, %p250
      %p252 = scmp.ne.s32.totalorder %s241, %s242
      %p253 = scmp.eq.s32.totalorder %s30, 0
      %p254 = por %p252, %p253
      %p255 = scmp.ne.s32.totalorder %s241, %s242
      %p256 = scmp.eq.s32.totalorder %s31, 7
      %p257 = por %p255, %p256
      %p259 = scmp.ne.s32.totalorder %s242, %s258
      %p260 = scmp.eq.s32.totalorder %s31, 0
      %p261 = por %p259, %p260
      %s262 = ssub.s32 %s34, %s43
      %p263 = scmp.eq.s32.totalorder %s262, 0
      %s265 = sadd.s32 %s264, 1
      %s266 = scalar_select %p263, %s264, %s265
      %p269 = pneg %p263
      %p270 = scmp.eq.s32.totalorder %s25, 7
      %p271 = por %p269, %p270
      %p272 = scmp.ne.s32.totalorder %s264, %s267
      %p273 = scmp.eq.s32.totalorder %s25, 0
      %p274 = por %p272, %p273
      %p275 = scmp.ne.s32.totalorder %s264, %s267
      %p276 = scmp.eq.s32.totalorder %s30, 7
      %p277 = por %p275, %p276
      %p278 = scmp.ne.s32.totalorder %s267, %s268
      %p279 = scmp.eq.s32.totalorder %s30, 0
      %p280 = por %p278, %p279
      %p281 = scmp.ne.s32.totalorder %s267, %s268
      %p282 = scmp.eq.s32.totalorder %s31, 7
      %p283 = por %p281, %p282
      %p285 = scmp.ne.s32.totalorder %s268, %s284
      %p286 = scmp.eq.s32.totalorder %s31, 0
      %p287 = por %p285, %p286
      %s288 = ssub.s32 %s34, %s43
      %p289 = scmp.eq.s32.totalorder %s288, 0
      %s291 = sadd.s32 %s290, 1
      %s292 = scalar_select %p289, %s290, %s291
      %p295 = pneg %p289
      %p296 = scmp.eq.s32.totalorder %s25, 7
      %p297 = por %p295, %p296
      %p298 = scmp.ne.s32.totalorder %s290, %s293
      %p299 = scmp.eq.s32.totalorder %s25, 0
      %p300 = por %p298, %p299
      %p301 = scmp.ne.s32.totalorder %s290, %s293
      %p302 = scmp.eq.s32.totalorder %s30, 7
      %p303 = por %p301, %p302
      %p304 = scmp.ne.s32.totalorder %s293, %s294
      %p305 = scmp.eq.s32.totalorder %s30, 0
      %p306 = por %p304, %p305
      %p307 = scmp.ne.s32.totalorder %s293, %s294
      %p308 = scmp.eq.s32.totalorder %s31, 7
      %p309 = por %p307, %p308
      %p311 = scmp.ne.s32.totalorder %s294, %s310
      %p312 = scmp.eq.s32.totalorder %s31, 0
      %p313 = por %p311, %p312
      %s315 = sadd.s32 %s314, 1
      %p318 = scmp.eq.s32.totalorder %s25, 7
      %p319 = scmp.ne.s32.totalorder %s314, %s316
      %p320 = scmp.eq.s32.totalorder %s25, 0
      %p321 = por %p319, %p320
      %p322 = scmp.ne.s32.totalorder %s314, %s316
      %p323 = scmp.eq.s32.totalorder %s30, 7
      %p324 = por %p322, %p323
      %p325 = scmp.ne.s32.totalorder %s316, %s317
      %p326 = scmp.eq.s32.totalorder %s30, 0
      %p327 = por %p325, %p326
      %p328 = scmp.ne.s32.totalorder %s316, %s317
      %p329 = scmp.eq.s32.totalorder %s31, 7
      %p330 = por %p328, %p329
      %p332 = scmp.ne.s32.totalorder %s317, %s331
      %p333 = scmp.eq.s32.totalorder %s31, 0
      %p334 = por %p332, %p333
      %s335 = ssub.s32 %s32, %s51
      %s336 = ssub.s32 %s33, %s47
      %s337 = sor.u32 %s335, %s336
      %p338 = scmp.eq.s32.totalorder %s337, 0
      %s340 = sadd.s32 %s339, 1
      %s341 = scalar_select %p338, %s339, %s340
      %p344 = pneg %p338
      %p345 = scmp.eq.s32.totalorder %s25, 7
      %p346 = por %p344, %p345
      %p347 = scmp.ne.s32.totalorder %s339, %s342
      %p348 = scmp.eq.s32.totalorder %s25, 0
      %p349 = por %p347, %p348
      %p350 = scmp.ne.s32.totalorder %s339, %s342
      %p351 = scmp.eq.s32.totalorder %s30, 7
      %p352 = por %p350, %p351
      %p353 = scmp.ne.s32.totalorder %s342, %s343
      %p354 = scmp.eq.s32.totalorder %s30, 0
      %p355 = por %p353, %p354
      %p356 = scmp.ne.s32.totalorder %s342, %s343
      %p357 = scmp.eq.s32.totalorder %s31, 7
      %p358 = por %p356, %p357
      %p360 = scmp.ne.s32.totalorder %s343, %s359
      %p361 = scmp.eq.s32.totalorder %s31, 0
      %p362 = por %p360, %p361
      %s363 = ssub.s32 %s32, %s51
      %s364 = ssub.s32 %s34, %s43
      %s365 = sor.u32 %s363, %s364
      %s366 = ssub.s32 %s33, %s47
      %s367 = sor.u32 %s365, %s366
      %p368 = scmp.eq.s32.totalorder %s367, 0
      %s370 = sadd.s32 %s369, 1
      %s371 = scalar_select %p368, %s369, %s370
      %p374 = pneg %p368
      %p375 = scmp.eq.s32.totalorder %s25, 7
      %p376 = por %p374, %p375
      %p377 = scmp.ne.s32.totalorder %s369, %s372
      %p378 = scmp.eq.s32.totalorder %s25, 0
      %p379 = por %p377, %p378
      %p380 = scmp.ne.s32.totalorder %s369, %s372
      %p381 = scmp.eq.s32.totalorder %s30, 7
      %p382 = por %p380, %p381
      %p383 = scmp.ne.s32.totalorder %s372, %s373
      %p384 = scmp.eq.s32.totalorder %s30, 0
      %p385 = por %p383, %p384
      %p386 = scmp.ne.s32.totalorder %s372, %s373
      %p387 = scmp.eq.s32.totalorder %s31, 7
      %p388 = por %p386, %p387
      %p390 = scmp.ne.s32.totalorder %s373, %s389
      %p391 = scmp.eq.s32.totalorder %s31, 0
      %p392 = por %p390, %p391
      %p393 = scmp.le.s32.totalorder 1, %s25
      %p394 = scmp.lt.s32.totalorder %s25, 9
      %p395 = pnand %p393, %p394
      %p396 = pneg %p395
      // Predicated region
      $region9: #{tpu_custom_call.1} parent=5 // pred_check
        _
      $region10: #{tpu_custom_call.1} parent=5 // pred_check_branch
        %398 = sbr.rel (%p395) target = $region12
      $region11: #{tpu_custom_call.1} parent=5 // pred_region
        %s399 = ssub.s32 %s25, 1
        // Predicated region
        $region13: #{tpu_custom_call.1} parent=11 // pred_check
          %p400 = pneg %p327
        $region14: #{tpu_custom_call.1} parent=11 // pred_check_branch
          %402 = sbr.rel (%p400) target = $region16
        $region15: #{tpu_custom_call.1} parent=11 // pred_region
          _
        $region16: #{tpu_custom_call.1} parent=11 // pred_fallthru
          _
      $region12: #{tpu_custom_call.1} parent=5 // pred_fallthru
        _
      %p403 = scmp.lt.s32.totalorder %s25, 8
      // Predicated region
      $region17: #{tpu_custom_call.1} parent=5 // pred_check
        %p404 = pneg %p403
      $region18: #{tpu_custom_call.1} parent=5 // pred_check_branch
        %406 = sbr.rel (%p404) target = $region20
      $region19: #{tpu_custom_call.1} parent=5 // pred_region
        // Predicated region
        $region21: #{tpu_custom_call.1} parent=19 // pred_check
          %p407 = pneg %p66
        $region22: #{tpu_custom_call.1} parent=19 // pred_check_branch
          %409 = sbr.rel (%p407) target = $region24
        $region23: #{tpu_custom_call.1} parent=19 // pred_region
          %p410 = scmp.lt.s32.totalorder %s32, 1
          %s411 = scalar_select %p410, %s32, 1
          %p412 = scmp.lt.s32.totalorder %s33, 0
          %s413 = scalar_select %p412, %s33, 0
          %s414 = sadd.s32 %s413, %s411
          %s415 = smul.addr %s414, 4
          %s416 = scalar_lea.vmem %s0, %s415
        $region24: #{tpu_custom_call.1} parent=19 // pred_fallthru
          _
        // Predicated region
        $region25: #{tpu_custom_call.1} parent=19 // pred_check
          %p417 = pneg %p92
        $region26: #{tpu_custom_call.1} parent=19 // pred_check_branch
          %419 = sbr.rel (%p417) target = $region28
        $region27: #{tpu_custom_call.1} parent=19 // pred_region
          %p420 = scmp.lt.s32.totalorder %s32, 1
          %s421 = scalar_select %p420, %s32, 1
          %s422 = smul.addr %s421, 4
          %s423 = scalar_lea.vmem %s1, %s422
        $region28: #{tpu_custom_call.1} parent=19 // pred_fallthru
          _
        // Predicated region
        $region29: #{tpu_custom_call.1} parent=19 // pred_check
          %p424 = pneg %p118
        $region30: #{tpu_custom_call.1} parent=19 // pred_check_branch
          %426 = sbr.rel (%p424) target = $region32
        $region31: #{tpu_custom_call.1} parent=19 // pred_region
          %p427 = scmp.lt.s32.totalorder %s32, 1
          %s428 = scalar_select %p427, %s32, 1
          %s429 = smul.addr %s428, 4
          %s430 = scalar_lea.vmem %s2, %s429
        $region32: #{tpu_custom_call.1} parent=19 // pred_fallthru
          _
        // Predicated region
        $region33: #{tpu_custom_call.1} parent=19 // pred_check
          %p431 = pneg %p144
        $region34: #{tpu_custom_call.1} parent=19 // pred_check_branch
          %433 = sbr.rel (%p431) target = $region36
        $region35: #{tpu_custom_call.1} parent=19 // pred_region
          %p434 = scmp.lt.s32.totalorder %s34, 3
          %s435 = scalar_select %p434, %s34, 3
          %s436 = smul.addr %s435, 4
          %s437 = smul.addr %s436, 4
          %s438 = scalar_lea.vmem %s3, %s437
        $region36: #{tpu_custom_call.1} parent=19 // pred_fallthru
          _
        // Predicated region
        $region37: #{tpu_custom_call.1} parent=19 // pred_check
          %p439 = pneg %p170
        $region38: #{tpu_custom_call.1} parent=19 // pred_check_branch
          %441 = sbr.rel (%p439) target = $region40
        $region39: #{tpu_custom_call.1} parent=19 // pred_region
          %p442 = scmp.lt.s32.totalorder %s34, 3
          %s443 = scalar_select %p442, %s34, 3
          %s444 = scalar_lea.vmem %s4, %s443
        $region40: #{tpu_custom_call.1} parent=19 // pred_fallthru
          _
        // Predicated region
        $region41: #{tpu_custom_call.1} parent=19 // pred_check
          %p445 = pneg %p196
        $region42: #{tpu_custom_call.1} parent=19 // pred_check_branch
          %447 = sbr.rel (%p445) target = $region44
        $region43: #{tpu_custom_call.1} parent=19 // pred_region
          %p448 = scmp.lt.s32.totalorder %s34, 3
          %s449 = scalar_select %p448, %s34, 3
          %s450 = smul.addr %s449, 4
          %s451 = smul.addr %s450, 4
          %s452 = scalar_lea.vmem %s5, %s451
        $region44: #{tpu_custom_call.1} parent=19 // pred_fallthru
          _
        // Predicated region
        $region45: #{tpu_custom_call.1} parent=19 // pred_check
          %p453 = pneg %p222
        $region46: #{tpu_custom_call.1} parent=19 // pred_check_branch
          %455 = sbr.rel (%p453) target = $region48
        $region47: #{tpu_custom_call.1} parent=19 // pred_region
          %p456 = scmp.lt.s32.totalorder %s34, 3
          %s457 = scalar_select %p456, %s34, 3
          %s458 = scalar_lea.vmem %s6, %s457
        $region48: #{tpu_custom_call.1} parent=19 // pred_fallthru
          _
        // Predicated region
        $region49: #{tpu_custom_call.1} parent=19 // pred_check
          %p459 = pneg %p248
        $region50: #{tpu_custom_call.1} parent=19 // pred_check_branch
          %461 = sbr.rel (%p459) target = $region52
        $region51: #{tpu_custom_call.1} parent=19 // pred_region
          %p462 = scmp.lt.s32.totalorder %s34, 3
          %s463 = scalar_select %p462, %s34, 3
          %s464 = smul.addr %s463, 4
          %s465 = smul.addr %s464, 4
          %s466 = scalar_lea.vmem %s7, %s465
        $region52: #{tpu_custom_call.1} parent=19 // pred_fallthru
          _
        // Predicated region
        $region53: #{tpu_custom_call.1} parent=19 // pred_check
          %p467 = pneg %p274
        $region54: #{tpu_custom_call.1} parent=19 // pred_check_branch
          %469 = sbr.rel (%p467) target = $region56
        $region55: #{tpu_custom_call.1} parent=19 // pred_region
          %p470 = scmp.lt.s32.totalorder %s34, 3
          %s471 = scalar_select %p470, %s34, 3
          %s472 = scalar_lea.vmem %s8, %s471
        $region56: #{tpu_custom_call.1} parent=19 // pred_fallthru
          _
        // Predicated region
        $region57: #{tpu_custom_call.1} parent=19 // pred_check
          %p473 = pneg %p300
        $region58: #{tpu_custom_call.1} parent=19 // pred_check_branch
          %475 = sbr.rel (%p473) target = $region60
        $region59: #{tpu_custom_call.1} parent=19 // pred_region
          %p476 = scmp.lt.s32.totalorder %s34, 3
          %s477 = scalar_select %p476, %s34, 3
          %s478 = smul.addr %s477, 4
          %s479 = scalar_lea.vmem %s9, %s478
        $region60: #{tpu_custom_call.1} parent=19 // pred_fallthru
          _
      $region20: #{tpu_custom_call.1} parent=5 // pred_fallthru
        _
      %p480 = scmp.le.s32.totalorder 1, %s25
      %p481 = scmp.lt.s32.totalorder %s25, 9
      %p482 = pnand %p480, %p481
      %p483 = pneg %p482
      // Predicated region
      $region61: #{tpu_custom_call.1} parent=5 // pred_check
        _
      $region62: #{tpu_custom_call.1} parent=5 // pred_check_branch
        %485 = sbr.rel (%p482) target = $region64
      $region63: #{tpu_custom_call.1} parent=5 // pred_region
        %s486 = ssub.s32 %s25, 1
        %p487 = scmp.lt.s32.totalorder %s35, 1
        %s488 = scalar_select %p487, %s35, 1
        %p489 = scmp.lt.s32.totalorder %s36, 0
        %s490 = scalar_select %p489, %s36, 0
        %s491 = sadd.s32 %s490, %s488
        %s492 = smul.addr %s491, 4
        %s493 = scalar_lea.vmem %s0, %s492
        %p494 = pneg %p72
        %p495 = pneg %p69
        %p496 = scmp.lt.s32.totalorder %s35, 1
        %s497 = scalar_select %p496, %s35, 1
        %s498 = smul.addr %s497, 4
        %s499 = scalar_lea.vmem %s1, %s498
        %p500 = pneg %p98
        %p501 = pneg %p95
        %p502 = scmp.lt.s32.totalorder %s35, 1
        %s503 = scalar_select %p502, %s35, 1
        %s504 = smul.addr %s503, 4
        %s505 = scalar_lea.vmem %s2, %s504
        %p506 = pneg %p124
        %p507 = pneg %p121
        %p508 = scmp.lt.s32.totalorder %s37, 3
        %s509 = scalar_select %p508, %s37, 3
        %s510 = smul.addr %s509, 4
        %s511 = smul.addr %s510, 4
        %s512 = scalar_lea.vmem %s3, %s511
        %p513 = pneg %p150
        %p514 = pneg %p147
        %p515 = scmp.lt.s32.totalorder %s37, 3
        %s516 = scalar_select %p515, %s37, 3
        %s517 = scalar_lea.vmem %s4, %s516
        %p518 = pneg %p176
        %p519 = pneg %p173
        %p520 = scmp.lt.s32.totalorder %s37, 3
        %s521 = scalar_select %p520, %s37, 3
        %s522 = smul.addr %s521, 4
        %s523 = smul.addr %s522, 4
        %s524 = scalar_lea.vmem %s5, %s523
        %p525 = pneg %p202
        %p526 = pneg %p199
        %p527 = scmp.lt.s32.totalorder %s37, 3
        %s528 = scalar_select %p527, %s37, 3
        %s529 = scalar_lea.vmem %s6, %s528
        %p530 = pneg %p228
        %p531 = pneg %p225
        %p532 = scmp.lt.s32.totalorder %s37, 3
        %s533 = scalar_select %p532, %s37, 3
        %s534 = smul.addr %s533, 4
        %s535 = smul.addr %s534, 4
        %s536 = scalar_lea.vmem %s7, %s535
        %p537 = pneg %p254
        %p538 = pneg %p251
        %p539 = scmp.lt.s32.totalorder %s37, 3
        %s540 = scalar_select %p539, %s37, 3
        %s541 = scalar_lea.vmem %s8, %s540
        %p542 = pneg %p280
        %p543 = pneg %p277
        %p544 = scmp.lt.s32.totalorder %s37, 3
        %s545 = scalar_select %p544, %s37, 3
        %s546 = smul.addr %s545, 4
        %s547 = scalar_lea.vmem %s9, %s546
        %p548 = pneg %p306
        %p549 = pneg %p303
        %p550 = pneg %p327
        %p551 = pneg %p324
        %p552 = pneg %p355
        %p553 = pneg %p352
        %s554 = sand.u32 %s342, 1
        %s555 = scalar_lea.sflag [#allocation3], %s554
        %s556 = sand.u32 %s342, 1
        %s557 = smul.addr %s556, 8
        %s558 = scalar_lea.vmem [#allocation2], %s557
        %p559 = pneg %p385
        %p560 = pneg %p382
        %s561 = sand.u32 %s372, 1
        %s562 = scalar_lea.sflag [#allocation5], %s561
        %s563 = sand.u32 %s372, 1
        %s564 = smul.addr %s563, 8
        %s565 = scalar_lea.vmem [#allocation4], %s564
        %p566 = scmp.lt.s32.totalorder %s35, 1
        %s567 = scalar_select %p566, %s35, 1
        %p568 = scmp.lt.s32.totalorder %s36, 0
        %s569 = scalar_select %p568, %s36, 0
        %s570 = sadd.s32 %s569, %s567
        %s571 = smul.addr %s570, 4
        %s572 = scalar_lea.vmem %s0, %s571
        %p573 = scmp.lt.s32.totalorder %s35, 1
        %s574 = scalar_select %p573, %s35, 1
        %s575 = smul.addr %s574, 4
        %s576 = scalar_lea.vmem %s1, %s575
        %p577 = scmp.lt.s32.totalorder %s35, 1
        %s578 = scalar_select %p577, %s35, 1
        %s579 = smul.addr %s578, 4
        %s580 = scalar_lea.vmem %s2, %s579
        %p581 = scmp.lt.s32.totalorder %s37, 3
        %s582 = scalar_select %p581, %s37, 3
        %s583 = smul.addr %s582, 4
        %s584 = smul.addr %s583, 4
        %s585 = scalar_lea.vmem %s3, %s584
        %p586 = scmp.lt.s32.totalorder %s37, 3
        %s587 = scalar_select %p586, %s37, 3
        %s588 = scalar_lea.vmem %s4, %s587
        %p589 = scmp.lt.s32.totalorder %s37, 3
        %s590 = scalar_select %p589, %s37, 3
        %s591 = smul.addr %s590, 4
        %s592 = smul.addr %s591, 4
        %s593 = scalar_lea.vmem %s5, %s592
        %p594 = scmp.lt.s32.totalorder %s37, 3
        %s595 = scalar_select %p594, %s37, 3
        %s596 = scalar_lea.vmem %s6, %s595
        %p597 = scmp.lt.s32.totalorder %s37, 3
        %s598 = scalar_select %p597, %s37, 3
        %s599 = smul.addr %s598, 4
        %s600 = smul.addr %s599, 4
        %s601 = scalar_lea.vmem %s7, %s600
        %p602 = scmp.lt.s32.totalorder %s37, 3
        %s603 = scalar_select %p602, %s37, 3
        %s604 = scalar_lea.vmem %s8, %s603
        %p605 = scmp.lt.s32.totalorder %s37, 3
        %s606 = scalar_select %p605, %s37, 3
        %s607 = smul.addr %s606, 4
        %s608 = scalar_lea.vmem %s9, %s607
        %v610 = vld [vmem:[%s572] sm:$0xf]
        %v611 = vld [vmem:[%s576] sm:$0xf]
        %v612 = vld [vmem:[%s580] sm:$0xf]
        %v613 = vld [vmem:[%s585] sm:$0xf]
        %v614 = vld [vmem:[%s585 + $0x4] sm:$0xf]
        %v615 = vld [vmem:[%s585 + $0x8] sm:$0xf]
        %v616 = vld [vmem:[%s585 + $0xc] sm:$0xf]
        %v617 = vld [vmem:[%s593] sm:$0xf]
        %v618 = vld [vmem:[%s593 + $0x4] sm:$0xf]
        %v619 = vld [vmem:[%s593 + $0x8] sm:$0xf]
        %v620 = vld [vmem:[%s593 + $0xc] sm:$0xf]
        %v621 = vld [vmem:[%s601] sm:$0xf]
        %v622 = vld [vmem:[%s601 + $0x4] sm:$0xf]
        %v623 = vld [vmem:[%s601 + $0x8] sm:$0xf]
        %v624 = vld [vmem:[%s601 + $0xc] sm:$0xf]
        %v625 = vld [vmem:[%s608] sm:$0xf]
        %v626 = vld [vmem:[%s588] sm:$0x1]
        %v628 = vlaneseq
        %v629 = vshrl.u32 %v628, 7
        %v630 = vsub.s32 0, %v629
        %v631 = vrot.slane %v626, %v630
        %v637 = vunpack.c.l.b16 %v613
        %v638 = vunpack.c.l.b16 %v614
        %v639 = vunpack.c.l.b16 %v615
        %v640 = vunpack.c.l.b16 %v616
        %v641 = vpack.c.b16 %v638, %v637
        %v642 = vpack.c.b16 %v640, %v639
        %vm645 = vcmask 261120
        %v647 = vsel %vm645, %v610, 0
        %649 = vmatprep.subr.bf16.mxu0 0
        %650 = vmatpush1.bf16.msra.mxu0 %v641
        %651 = vmatprep.subr.bf16.mxu0 0
        %652 = vmatpush1.bf16.msra.mxu0 %v642
        %653 = vmatprep.subr.bf16.mxu0 0
        %654 = vmatpush1.bf16.msra.mxu0 0
        %655 = vmatprep.subr.bf16.mxu0 0
        %656 = vmatpush1.bf16.msra.mxu0 0
        %657 = vmatprep.subr.bf16.mxu0 0
        %658 = vmatpush1.bf16.msra.mxu0 0
        %659 = vmatprep.subr.bf16.mxu0 0
        %660 = vmatpush1.bf16.msra.mxu0 0
        %661 = vmatprep.subr.bf16.mxu0 0
        %662 = vmatpush1.bf16.msra.mxu0 0
        %663 = vmatprep.subr.bf16.mxu0 0
        %664 = vmatpush1.bf16.msra.mxu0 0
        %665 = vmatprep.subr.bf16.mxu0 0
        %666 = vmatpush1.bf16.msra.mxu0 0
        %667 = vmatprep.subr.bf16.mxu0 0
        %668 = vmatpush1.bf16.msra.mxu0 0
        %669 = vmatprep.subr.bf16.mxu0 0
        %670 = vmatpush1.bf16.msra.mxu0 0
        %671 = vmatprep.subr.bf16.mxu0 0
        %672 = vmatpush1.bf16.msra.mxu0 0
        %673 = vmatprep.subr.bf16.mxu0 0
        %674 = vmatpush1.bf16.msra.mxu0 0
        %675 = vmatprep.subr.bf16.mxu0 0
        %676 = vmatpush1.bf16.msra.mxu0 0
        %677 = vmatprep.subr.bf16.mxu0 0
        %678 = vmatpush1.bf16.msra.mxu0 0
        %679 = vmatprep.subr.bf16.mxu0 0
        %680 = vmatpush1.bf16.msra.mxu0 0
        %681 = vmatprep.mubr.bf16.mxu0 0
        %682 = vmatmul.mubr.bf16.gmra.mrb[0].mxu0 %v647
        %v683 = vpop.f32.mrb[0].mxu0
        %v684 = vadd.f32 %v631, %v683
        %v685 = vpop.f32.mrb[0].mxu0
        %v686 = vpop.f32.mrb[0].mxu0
        %v687 = vpop.f32.mrb[0].mxu0
        %688 = vdwg.mxu0
        %v689 = vld [vmem:[%s596] sm:$0x1]
        %v691 = vlaneseq
        %v692 = vshrl.u32 %v691, 7
        %v693 = vsub.s32 0, %v692
        %v694 = vrot.slane %v689, %v693
        %v700 = vunpack.c.l.b16 %v617
        %v701 = vunpack.c.l.b16 %v618
        %v702 = vunpack.c.l.b16 %v619
        %v703 = vunpack.c.l.b16 %v620
        %v704 = vpack.c.b16 %v701, %v700
        %v705 = vpack.c.b16 %v703, %v702
        %v709 = vsel %vm645, %v611, 0
        %711 = vmatprep.subr.bf16.mxu0 0
        %712 = vmatpush1.bf16.msra.mxu0 %v704
        %713 = vmatprep.subr.bf16.mxu0 0
        %714 = vmatpush1.bf16.msra.mxu0 %v705
        %715 = vmatprep.subr.bf16.mxu0 0
        %716 = vmatpush1.bf16.msra.mxu0 0
        %717 = vmatprep.subr.bf16.mxu0 0
        %718 = vmatpush1.bf16.msra.mxu0 0
        %719 = vmatprep.subr.bf16.mxu0 0
        %720 = vmatpush1.bf16.msra.mxu0 0
        %721 = vmatprep.subr.bf16.mxu0 0
        %722 = vmatpush1.bf16.msra.mxu0 0
        %723 = vmatprep.subr.bf16.mxu0 0
        %724 = vmatpush1.bf16.msra.mxu0 0
        %725 = vmatprep.subr.bf16.mxu0 0
        %726 = vmatpush1.bf16.msra.mxu0 0
        %727 = vmatprep.subr.bf16.mxu0 0
        %728 = vmatpush1.bf16.msra.mxu0 0
        %729 = vmatprep.subr.bf16.mxu0 0
        %730 = vmatpush1.bf16.msra.mxu0 0
        %731 = vmatprep.subr.bf16.mxu0 0
        %732 = vmatpush1.bf16.msra.mxu0 0
        %733 = vmatprep.subr.bf16.mxu0 0
        %734 = vmatpush1.bf16.msra.mxu0 0
        %735 = vmatprep.subr.bf16.mxu0 0
        %736 = vmatpush1.bf16.msra.mxu0 0
        %737 = vmatprep.subr.bf16.mxu0 0
        %738 = vmatpush1.bf16.msra.mxu0 0
        %739 = vmatprep.subr.bf16.mxu0 0
        %740 = vmatpush1.bf16.msra.mxu0 0
        %741 = vmatprep.subr.bf16.mxu0 0
        %742 = vmatpush1.bf16.msra.mxu0 0
        %743 = vmatprep.mubr.bf16.mxu0 0
        %744 = vmatmul.mubr.bf16.gmra.mrb[0].mxu0 %v709
        %v745 = vpop.f32.mrb[0].mxu0
        %v746 = vadd.f32 %v694, %v745
        %v747 = vpop.f32.mrb[0].mxu0
        %v748 = vpop.f32.mrb[0].mxu0
        %v749 = vpop.f32.mrb[0].mxu0
        %750 = vdwg.mxu0
        %v751 = vld [vmem:[%s604] sm:$0x1]
        %v753 = vlaneseq
        %v754 = vshrl.u32 %v753, 7
        %v755 = vsub.s32 0, %v754
        %v756 = vrot.slane %v751, %v755
        %v762 = vunpack.c.l.b16 %v621
        %v763 = vunpack.c.l.b16 %v622
        %v764 = vunpack.c.l.b16 %v623
        %v765 = vunpack.c.l.b16 %v624
        %v766 = vpack.c.b16 %v763, %v762
        %v767 = vpack.c.b16 %v765, %v764
        %v771 = vsel %vm645, %v612, 0
        %773 = vmatprep.subr.bf16.mxu0 0
        %774 = vmatpush1.bf16.msra.mxu0 %v766
        %775 = vmatprep.subr.bf16.mxu0 0
        %776 = vmatpush1.bf16.msra.mxu0 %v767
        %777 = vmatprep.subr.bf16.mxu0 0
        %778 = vmatpush1.bf16.msra.mxu0 0
        %779 = vmatprep.subr.bf16.mxu0 0
        %780 = vmatpush1.bf16.msra.mxu0 0
        %781 = vmatprep.subr.bf16.mxu0 0
        %782 = vmatpush1.bf16.msra.mxu0 0
        %783 = vmatprep.subr.bf16.mxu0 0
        %784 = vmatpush1.bf16.msra.mxu0 0
        %785 = vmatprep.subr.bf16.mxu0 0
        %786 = vmatpush1.bf16.msra.mxu0 0
        %787 = vmatprep.subr.bf16.mxu0 0
        %788 = vmatpush1.bf16.msra.mxu0 0
        %789 = vmatprep.subr.bf16.mxu0 0
        %790 = vmatpush1.bf16.msra.mxu0 0
        %791 = vmatprep.subr.bf16.mxu0 0
        %792 = vmatpush1.bf16.msra.mxu0 0
        %793 = vmatprep.subr.bf16.mxu0 0
        %794 = vmatpush1.bf16.msra.mxu0 0
        %795 = vmatprep.subr.bf16.mxu0 0
        %796 = vmatpush1.bf16.msra.mxu0 0
        %797 = vmatprep.subr.bf16.mxu0 0
        %798 = vmatpush1.bf16.msra.mxu0 0
        %799 = vmatprep.subr.bf16.mxu0 0
        %800 = vmatpush1.bf16.msra.mxu0 0
        %801 = vmatprep.subr.bf16.mxu0 0
        %802 = vmatpush1.bf16.msra.mxu0 0
        %803 = vmatprep.subr.bf16.mxu0 0
        %804 = vmatpush1.bf16.msra.mxu0 0
        %805 = vmatprep.mubr.bf16.mxu0 0
        %806 = vmatmul.mubr.bf16.gmra.mrb[0].mxu0 %v771
        %v807 = vpop.f32.mrb[0].mxu0
        %v808 = vadd.f32 %v756, %v807
        %v809 = vpop.f32.mrb[0].mxu0
        %v810 = vpop.f32.mrb[0].mxu0
        %v811 = vpop.f32.mrb[0].mxu0
        %812 = vdwg.mxu0
        %v813 = vpack.c.bf16 %v684, %v684
        %v814 = vpack.c.bf16 %v746, %v746
        %vm815 = vcmask 64512
        %v817 = vsel %vm815, %v813, 0
        %v820 = vsel %vm815, %v814, 0
        %822 = vmatprep.subr.bf16.mxu0 0
        %823 = vmatpush1.bf16.xpose.msra.mxu0 %v820
        %824 = vmatprep.subr.bf16.mxu0 0
        %825 = vmatpush1.bf16.xpose.msra.mxu0 0
        %826 = vmatprep.subr.bf16.mxu0 0
        %827 = vmatpush1.bf16.xpose.msra.mxu0 0
        %828 = vmatprep.subr.bf16.mxu0 0
        %829 = vmatpush1.bf16.xpose.msra.mxu0 0
        %830 = vmatprep.subr.bf16.mxu0 0
        %831 = vmatpush1.bf16.xpose.msra.mxu0 0
        %832 = vmatprep.subr.bf16.mxu0 0
        %833 = vmatpush1.bf16.xpose.msra.mxu0 0
        %834 = vmatprep.subr.bf16.mxu0 0
        %835 = vmatpush1.bf16.xpose.msra.mxu0 0
        %836 = vmatprep.subr.bf16.mxu0 0
        %837 = vmatpush1.bf16.xpose.msra.mxu0 0
        %838 = vmatprep.subr.bf16.mxu0 0
        %839 = vmatpush1.bf16.xpose.msra.mxu0 0
        %840 = vmatprep.subr.bf16.mxu0 0
        %841 = vmatpush1.bf16.xpose.msra.mxu0 0
        %842 = vmatprep.subr.bf16.mxu0 0
        %843 = vmatpush1.bf16.xpose.msra.mxu0 0
        %844 = vmatprep.subr.bf16.mxu0 0
        %845 = vmatpush1.bf16.xpose.msra.mxu0 0
        %846 = vmatprep.subr.bf16.mxu0 0
        %847 = vmatpush1.bf16.xpose.msra.mxu0 0
        %848 = vmatprep.subr.bf16.mxu0 0
        %849 = vmatpush1.bf16.xpose.msra.mxu0 0
        %850 = vmatprep.subr.bf16.mxu0 0
        %851 = vmatpush1.bf16.xpose.msra.mxu0 0
        %852 = vmatprep.subr.bf16.mxu0 0
        %853 = vmatpush1.bf16.xpose.msra.mxu0 0
        %854 = vmatprep.mubr.bf16.mxu0 0
        %855 = vmatmul.mubr.bf16.gmra.mrb[0].mxu0 %v817
        %v856 = vpop.f32.mrb[0].mxu0
        %v857 = vadd.f32 0.0, %v856
        %v858 = vpop.f32.mrb[0].mxu0
        %v859 = vpop.f32.mrb[0].mxu0
        %v860 = vpop.f32.mrb[0].mxu0
        %861 = vdwg.mxu0
        %v862 = vsel %vm815, %v857, -inf
        %863 = vmax.xlane.f32.xlu0 %v862
        %v864 = vpop.xlane.xlu0 %863
        %v865 = vsub.f32 %v857, %v864
        %v866 = vmul.f32 %v865, 1.442695
        %v867 = vpow.pop %v866
        %v868 = vsel %vm815, %v867, 0.0
        %869 = vadd.xlane.f32.xlu0 %v868
        %v870 = vpop.xlane.xlu0 %869
        %v871 = vrcp.pop %v870
        %v872 = vmul.f32 %v867, %v871
        %873 = vst.msk [vmem:[%s565] sm:$0xff] %vm815, %v872
        %v874 = vpack.c.bf16 %v872, %v872
        %v875 = vpack.c.bf16 %v808, %v808
        %v877 = vsel %vm815, %v874, 0
        %vm879 = vcmask 1043456
        %v881 = vsel %vm879, %v875, 0
        %883 = vmatprep.subr.bf16.mxu0 0
        %884 = vmatpush1.bf16.msra.mxu0 %v881
        %885 = vmatprep.subr.bf16.mxu0 0
        %886 = vmatpush1.bf16.msra.mxu0 0
        %887 = vmatprep.subr.bf16.mxu0 0
        %888 = vmatpush1.bf16.msra.mxu0 0
        %889 = vmatprep.subr.bf16.mxu0 0
        %890 = vmatpush1.bf16.msra.mxu0 0
        %891 = vmatprep.subr.bf16.mxu0 0
        %892 = vmatpush1.bf16.msra.mxu0 0
        %893 = vmatprep.subr.bf16.mxu0 0
        %894 = vmatpush1.bf16.msra.mxu0 0
        %895 = vmatprep.subr.bf16.mxu0 0
        %896 = vmatpush1.bf16.msra.mxu0 0
        %897 = vmatprep.subr.bf16.mxu0 0
        %898 = vmatpush1.bf16.msra.mxu0 0
        %899 = vmatprep.subr.bf16.mxu0 0
        %900 = vmatpush1.bf16.msra.mxu0 0
        %901 = vmatprep.subr.bf16.mxu0 0
        %902 = vmatpush1.bf16.msra.mxu0 0
        %903 = vmatprep.subr.bf16.mxu0 0
        %904 = vmatpush1.bf16.msra.mxu0 0
        %905 = vmatprep.subr.bf16.mxu0 0
        %906 = vmatpush1.bf16.msra.mxu0 0
        %907 = vmatprep.subr.bf16.mxu0 0
        %908 = vmatpush1.bf16.msra.mxu0 0
        %909 = vmatprep.subr.bf16.mxu0 0
        %910 = vmatpush1.bf16.msra.mxu0 0
        %911 = vmatprep.subr.bf16.mxu0 0
        %912 = vmatpush1.bf16.msra.mxu0 0
        %913 = vmatprep.subr.bf16.mxu0 0
        %914 = vmatpush1.bf16.msra.mxu0 0
        %915 = vmatprep.mubr.bf16.mxu0 0
        %916 = vmatmul.mubr.bf16.gmra.mrb[0].mxu0 %v877
        %v917 = vpop.f32.mrb[0].mxu0
        %v918 = vadd.f32 0.0, %v917
        %v919 = vpop.f32.mrb[0].mxu0
        %v920 = vpop.f32.mrb[0].mxu0
        %v921 = vpop.f32.mrb[0].mxu0
        %922 = vdwg.mxu0
        %v923 = vpack.c.bf16 %v918, %v918
        %v925 = vsel %vm815, %v923, 0
        %v928 = vsel %vm879, %v625, 0
        %930 = vmatprep.subr.bf16.mxu0 0
        %931 = vmatpush1.bf16.msra.mxu0 %v928
        %932 = vmatprep.subr.bf16.mxu0 0
        %933 = vmatpush1.bf16.msra.mxu0 0
        %934 = vmatprep.subr.bf16.mxu0 0
        %935 = vmatpush1.bf16.msra.mxu0 0
        %936 = vmatprep.subr.bf16.mxu0 0
        %937 = vmatpush1.bf16.msra.mxu0 0
        %938 = vmatprep.subr.bf16.mxu0 0
        %939 = vmatpush1.bf16.msra.mxu0 0
        %940 = vmatprep.subr.bf16.mxu0 0
        %941 = vmatpush1.bf16.msra.mxu0 0
        %942 = vmatprep.subr.bf16.mxu0 0
        %943 = vmatpush1.bf16.msra.mxu0 0
        %944 = vmatprep.subr.bf16.mxu0 0
        %945 = vmatpush1.bf16.msra.mxu0 0
        %946 = vmatprep.subr.bf16.mxu0 0
        %947 = vmatpush1.bf16.msra.mxu0 0
        %948 = vmatprep.subr.bf16.mxu0 0
        %949 = vmatpush1.bf16.msra.mxu0 0
        %950 = vmatprep.subr.bf16.mxu0 0
        %951 = vmatpush1.bf16.msra.mxu0 0
        %952 = vmatprep.subr.bf16.mxu0 0
        %953 = vmatpush1.bf16.msra.mxu0 0
        %954 = vmatprep.subr.bf16.mxu0 0
        %955 = vmatpush1.bf16.msra.mxu0 0
        %956 = vmatprep.subr.bf16.mxu0 0
        %957 = vmatpush1.bf16.msra.mxu0 0
        %958 = vmatprep.subr.bf16.mxu0 0
        %959 = vmatpush1.bf16.msra.mxu0 0
        %960 = vmatprep.subr.bf16.mxu0 0
        %961 = vmatpush1.bf16.msra.mxu0 0
        %962 = vmatprep.mubr.bf16.mxu0 0
        %963 = vmatmul.mubr.bf16.gmra.mrb[0].mxu0 %v925
        %v964 = vpop.f32.mrb[0].mxu0
        %v965 = vadd.f32 0.0, %v964
        %v966 = vpop.f32.mrb[0].mxu0
        %v967 = vpop.f32.mrb[0].mxu0
        %v968 = vpop.f32.mrb[0].mxu0
        %969 = vdwg.mxu0
        %p970 = scmp.eq.s32.totalorder %s37, 0
        // Predicated region
        $region65: #{tpu_custom_call.1} parent=63 // pred_check
          %p971 = pneg %p970
        $region66: #{tpu_custom_call.1} parent=63 // pred_check_branch
          %973 = sbr.rel (%p971) target = $region68
        $region67: #{tpu_custom_call.1} parent=63 // pred_region
          %v974 = vld [vmem:[%s10] sm:$0x1]
          %v976 = vlaneseq
          %v977 = vshrl.u32 %v976, 7
          %v978 = vsub.s32 0, %v977
          %v979 = vrot.slane %v974, %v978
          %v981 = vadd.f32 %v965, %v979
          %982 = vst.msk [vmem:[%s558] sm:$0xff] %vm645, %v981
        $region68: #{tpu_custom_call.1} parent=63 // pred_fallthru
          _
        %p983 = scmp.ne.s32.totalorder %s37, 0
        // Predicated region
        $region69: #{tpu_custom_call.1} parent=63 // pred_check
          %p984 = pneg %p983
        $region70: #{tpu_custom_call.1} parent=63 // pred_check_branch
          %986 = sbr.rel (%p984) target = $region72
        $region71: #{tpu_custom_call.1} parent=63 // pred_region
          %v987 = vld [vmem:[%s558] sm:$0xff]
          %v988 = vadd.f32 %v987, %v965
          %989 = vst.msk [vmem:[%s558] sm:$0xff] %vm645, %v988
        $region72: #{tpu_custom_call.1} parent=63 // pred_fallthru
          _
        %s990 = sand.u32 %s342, 1
        %s991 = scalar_lea.sflag [#allocation3], %s990
        %s992 = sand.u32 %s342, 1
        %s993 = smul.addr %s992, 8
        %s994 = scalar_lea.vmem [#allocation2], %s993
        %s995 = sand.u32 %s372, 1
        %s996 = scalar_lea.sflag [#allocation5], %s995
        %s997 = sand.u32 %s372, 1
        %s998 = smul.addr %s997, 8
        %s999 = scalar_lea.vmem [#allocation4], %s998
        // Predicated region
        $region73: #{tpu_custom_call.1} parent=63 // pred_check
          %p1000 = pneg %p352
        $region74: #{tpu_custom_call.1} parent=63 // pred_check_branch
          %1002 = sbr.rel (%p1000) target = $region76
        $region75: #{tpu_custom_call.1} parent=63 // pred_region
          %s1004 = ssub.s32 128, 128
          %1005 = vsyncadd %s991, %s1004
          %s1006 = sadd.s32 %s36, %s35
          %s1007 = smul.addr %s1006, 128
          %s1008 = scalar_lea.hbm %s11, %s1007
          %s1010 = sshll.u32 %s994, 4
          %s1011 = int_to_ptr.vmem [resolvable:$true] %s1010
          %1013 = dma.vmem_to_hbm [thread:$0]  %s1011, 128, %s1008, %s991
        $region76: #{tpu_custom_call.1} parent=63 // pred_fallthru
          _
        // Predicated region
        $region77: #{tpu_custom_call.1} parent=63 // pred_check
          %p1014 = pneg %p382
        $region78: #{tpu_custom_call.1} parent=63 // pred_check_branch
          %1016 = sbr.rel (%p1014) target = $region80
        $region79: #{tpu_custom_call.1} parent=63 // pred_region
          %s1018 = ssub.s32 128, 128
          %1019 = vsyncadd %s996, %s1018
          %s1020 = sadd.s32 %s36, %s37
          %s1021 = smul.addr %s35, 4
          %s1022 = sadd.s32 %s1020, %s1021
          %s1023 = smul.addr %s1022, 128
          %s1024 = scalar_lea.hbm %s12, %s1023
          %s1026 = sshll.u32 %s999, 4
          %s1027 = int_to_ptr.vmem [resolvable:$true] %s1026
          %1029 = dma.vmem_to_hbm [thread:$0]  %s1027, 128, %s1024, %s996
        $region80: #{tpu_custom_call.1} parent=63 // pred_fallthru
          _
      $region64: #{tpu_custom_call.1} parent=5 // pred_fallthru
        _
      %p1030 = scmp.le.s32.totalorder 2, %s25
      // Predicated region
      $region81: #{tpu_custom_call.1} parent=5 // pred_check
        %p1031 = pneg %p1030
      $region82: #{tpu_custom_call.1} parent=5 // pred_check_branch
        %1033 = sbr.rel (%p1031) target = $region84
      $region83: #{tpu_custom_call.1} parent=5 // pred_region
        %s1034 = ssub.s32 %s25, 2
        // Predicated region
        $region85: #{tpu_custom_call.1} parent=83 // pred_check
          %p1035 = pneg %p358
        $region86: #{tpu_custom_call.1} parent=83 // pred_check_branch
          %1037 = sbr.rel (%p1035) target = $region88
        $region87: #{tpu_custom_call.1} parent=83 // pred_region
          %s1038 = sand.u32 %s343, 1
          %s1039 = scalar_lea.sflag [#allocation3], %s1038
          %s1040 = sand.u32 %s343, 1
          %s1041 = smul.addr %s1040, 8
          %s1042 = scalar_lea.vmem [#allocation2], %s1041
          %1043 = dma.done %s1039, 128
        $region88: #{tpu_custom_call.1} parent=83 // pred_fallthru
          _
        // Predicated region
        $region89: #{tpu_custom_call.1} parent=83 // pred_check
          %p1044 = pneg %p388
        $region90: #{tpu_custom_call.1} parent=83 // pred_check_branch
          %1046 = sbr.rel (%p1044) target = $region92
        $region91: #{tpu_custom_call.1} parent=83 // pred_region
          %s1047 = sand.u32 %s373, 1
          %s1048 = scalar_lea.sflag [#allocation5], %s1047
          %s1049 = sand.u32 %s373, 1
          %s1050 = smul.addr %s1049, 8
          %s1051 = scalar_lea.vmem [#allocation4], %s1050
          %1052 = dma.done %s1048, 128
        $region92: #{tpu_custom_call.1} parent=83 // pred_fallthru
          _
      $region84: #{tpu_custom_call.1} parent=5 // pred_fallthru
        _
    $region6: #{tpu_custom_call.1} parent=1 // loop_footer
      %s29 = sadd.s32 1, %s25
    $region7: #{tpu_custom_call.1} parent=1 // loop_footer_branch
      %24 = sbr.rel target = $region3
    $region8: #{tpu_custom_call.1} parent=1 // loop_exit
      _
    %1053 = vsyncpa [#allocation3], 1
    %s1054 = scalar_lea.sflag [#allocation3], 1
    %1055 = vsyncpa %s1054, 1
    %1056 = vsyncpa [#allocation5], 1
    %s1057 = scalar_lea.sflag [#allocation5], 1
    %1058 = vsyncpa %s1057, 1

</llo_original>
